<compile_context>
chip_gen: v7x
topology: tpu7x:2x2x1
jax: 0.10.0
libtpu: 0.0.40
codegen_flags: <defaults>
</compile_context>

<pallas_src>
import jax
import jax.numpy as jnp
from jax.experimental import pallas as pl
from jax.experimental.pallas import tpu as pltpu

_LANE = 128


# ------------------------------ small helpers ------------------------------ #

def _round_up(x, m):
    return ((x + m - 1) // m) * m


def _pad2(a, r, c):
    return jnp.pad(a, ((0, r - a.shape[0]), (0, c - a.shape[1])))


def _pad3(a, d0, d1, d2):
    return jnp.pad(a, ((0, d0 - a.shape[0]),
                       (0, d1 - a.shape[1]),
                       (0, d2 - a.shape[2])))


def _pick_tile(dim_pad, cap=512):
    """Largest tile in {512, 256, 128} (<= cap) dividing dim_pad (a multiple of 128)."""
    for t in (512, 256, 128):
        if t <= cap and dim_pad % t == 0:
            return t
    return 128


def _compiler_params(semantics, live_bytes):
    """dimension_semantics + an explicit scoped-VMEM limit sized from the tiles.

    live_bytes ~ sum of double-buffered block bytes + scratch; add pipeline slack,
    never shrink below a 32 MiB window, cap at 64 MiB (v7x physical VMEM per TC).
    """
    limit = int(min(max(int(live_bytes * 1.5) + (4 << 20), 32 << 20), 64 << 20))
    return pltpu.CompilerParams(dimension_semantics=semantics,
                                vmem_limit_bytes=limit)


# ----------------------------- Pallas kernels ------------------------------ #

def _xw_kernel(x_ref, w_ref, y_ref):
    # Y_{r, m-block} = X_{m-block} @ W_r   (bf16 x bf16 -> f32 acc -> bf16 out)
    y_ref[...] = jnp.dot(x_ref[...], w_ref[0],
                         preferred_element_type=jnp.float32).astype(y_ref.dtype)


def xw_stacked(x, w):
    """Y (R*Np, Fout) with Y[r*Np + j, :] = x[j, :] @ w[r], bf16 in / bf16 out.

    Grid is (R, M): each W_r is DMA'd once and stays VMEM-resident across the whole
    m loop (its block index is constant within r), and output blocks within one r are
    written back contiguously in HBM (m is the fastest grid axis)."""
    n_pad, fin = x.shape
    R, _, fout = w.shape
    tm = _pick_tile(n_pad)
    num_m = n_pad // tm
    grid = (R, num_m)

    x_spec = pl.BlockSpec((tm, fin), lambda r, m: (m, 0))
    w_spec = pl.BlockSpec((1, fin, fout), lambda r, m: (r, 0, 0))
    out_spec = pl.BlockSpec((tm, fout), lambda r, m: (r * num_m + m, 0))

    live = 2 * (tm * fin * 2 + fin * fout * 2 + tm * fout * 2)
    cost = pl.CostEstimate(
        flops=2 * R * n_pad * fin * fout,
        transcendentals=0,
        bytes_accessed=2 * (R * n_pad * fin + R * fin * fout + R * n_pad * fout),
    )
    return pl.pallas_call(
        _xw_kernel,
        out_shape=jax.ShapeDtypeStruct((R * n_pad, fout), jnp.bfloat16),
        grid_spec=pltpu.PrefetchScalarGridSpec(
            num_scalar_prefetch=0,
            grid=grid,
            in_specs=[x_spec, w_spec],
            out_specs=out_spec,
        ),
        compiler_params=_compiler_params(("parallel", "parallel"), live),
        cost_estimate=cost,
    )(x, w)


def _contract_kernel(kidx_ref, kcnt_ref, a_ref, y_ref, b_ref, o_ref, acc_ref):
    # out[m, n] = sum_k A_h[m, k] @ Y[k, n] + bias ; k iterates over the compacted
    # list of nonzero (TM, TK) blocks of A_h for this row-tile.
    m = pl.program_id(0)
    k = pl.program_id(2)

    @pl.when(k == 0)
    def _():
        acc_ref[...] = jnp.zeros_like(acc_ref)

    # Zero blocks of A_h were compacted out of the schedule: steps past kcnt[m]
    # re-alias the last valid block (so no new DMA is issued) and skip the matmul.
    @pl.when(k < kcnt_ref[m])
    def _():
        acc_ref[...] += jnp.dot(a_ref[...], y_ref[...],
                                preferred_element_type=jnp.float32)

    @pl.when(k == pl.num_programs(2) - 1)
    def _():
        o_ref[...] = (acc_ref[...] + b_ref[...]).astype(o_ref.dtype)


def build_block_schedule(a_h, tm, tk):
    """Per row-tile compacted list of nonzero (tm, tk) column-blocks of a_h + counts.

    kidx[m, j] for j < kcnt[m] is the j-th nonzero block column (ascending); padding
    entries are never dereferenced because the kernel clamps k to kcnt[m]-1."""
    n_pad, k_total = a_h.shape
    m_tiles, k_tiles = n_pad // tm, k_total // tk
    nnz = jnp.any(a_h.reshape(m_tiles, tm, k_tiles, tk) != 0, axis=(1, 3))
    ki = jnp.arange(k_tiles, dtype=jnp.int32)
    key = jnp.where(nnz, 0, k_tiles).astype(jnp.int32) + ki      # nonzero first, in order
    kidx = jnp.argsort(key, axis=1).astype(jnp.int32)            # (M_tiles, K_tiles)
    kcnt = jnp.maximum(nnz.sum(axis=1).astype(jnp.int32), 1)     # clamp: safe indexing
    return kidx, kcnt


def rgcn_contract(a_h, y, bias, kidx, kcnt, tm, tk, out_dtype):
    """out = a_h @ y + bias, a_h: (Np, R*Np) bf16, y: (R*Np, Fout) bf16, bias f32.

    Tiled (TM, TN, TK) with the stacked K axis as the reduction ("arbitrary") grid
    axis; all-zero A_h blocks are skipped via the scalar-prefetched schedule."""
    n_pad, k_total = a_h.shape
    _, fout = y.shape
    tn = _pick_tile(fout)
    grid = (n_pad // tm, fout // tn, k_total // tk)
    out_bytes = jnp.dtype(out_dtype).itemsize

    def a_map(m, n, k, kidx_ref, kcnt_ref):
        kk = jnp.minimum(k, kcnt_ref[m] - 1)
        return (m, kidx_ref[m, kk])

    def y_map(m, n, k, kidx_ref, kcnt_ref):
        kk = jnp.minimum(k, kcnt_ref[m] - 1)
        return (kidx_ref[m, kk], n)

    live = (2 * (tm * tk * 2 + tk * tn * 2 + tn * 4 + tm * tn * out_bytes)
            + tm * tn * 4)
    cost = pl.CostEstimate(
        flops=2 * n_pad * k_total * fout,
        transcendentals=0,
        bytes_accessed=2 * (n_pad * k_total + k_total * fout) + n_pad * fout * out_bytes,
    )

    return pl.pallas_call(
        _contract_kernel,
        out_shape=jax.ShapeDtypeStruct((n_pad, fout), out_dtype),
        grid_spec=pltpu.PrefetchScalarGridSpec(
            num_scalar_prefetch=2,
            grid=grid,
            in_specs=[
                pl.BlockSpec((tm, tk), a_map),
                pl.BlockSpec((tk, tn), y_map),
                pl.BlockSpec((1, tn), lambda m, n, k, kidx_ref, kcnt_ref: (0, n)),
            ],
            out_specs=pl.BlockSpec(
                (tm, tn), lambda m, n, k, kidx_ref, kcnt_ref: (m, n)),
            scratch_shapes=[pltpu.VMEM((tm, tn), jnp.float32)],
        ),
        compiler_params=_compiler_params(
            ("parallel", "parallel", "arbitrary"), live),
        cost_estimate=cost,
    )(kidx, kcnt, a_h, y, bias)


def _distmult_kernel(s_ref, p_ref, o_ref, out_ref):
    prod = (s_ref[...].astype(jnp.float32)
            * p_ref[...].astype(jnp.float32)
            * o_ref[...].astype(jnp.float32))
    out_ref[...] = jnp.sum(prod, axis=1, keepdims=True)


def distmult_score(s_emb, p_emb, o_emb):
    """scores[t] = sum_d s[t,d]*p[t,d]*o[t,d]; tiled over T (bf16 in, f32 out).

    TODO(synk): fuse the triple row-gather into the kernel (manual make_async_copy
    gathers of x / rel rows from a scalar-prefetched triple table) so the three
    (T, D) gathered tensors never hit HBM."""
    T, d_pad = s_emb.shape
    tt = 2048 if T >= 2048 else _round_up(T, _LANE)
    t_pad = _round_up(T, tt)

    def prep(a):
        return jnp.pad(a, ((0, t_pad - T), (0, 0)))

    in_spec = pl.BlockSpec((tt, d_pad), lambda t: (t, 0))
    live = 2 * (3 * tt * d_pad * 2 + tt * 4)
    out = pl.pallas_call(
        _distmult_kernel,
        out_shape=jax.ShapeDtypeStruct((t_pad, 1), jnp.float32),
        grid_spec=pltpu.PrefetchScalarGridSpec(
            num_scalar_prefetch=0,
            grid=(t_pad // tt,),
            in_specs=[in_spec, in_spec, in_spec],
            out_specs=pl.BlockSpec((tt, 1), lambda t: (t, 0)),
        ),
        compiler_params=_compiler_params(("parallel",), live),
    )(prep(s_emb), prep(p_emb), prep(o_emb))
    return out[:T, 0]


# ------------------------------- glue (JAX) -------------------------------- #

def build_adjacency_hstack(edges, num_nodes, num_rels, n_pad):
    """Horizontally-stacked dense adjacency (Np, R*Np), column index = r*Np + j,
    with inverse relations + self-loops, row-normalized over the stacked row
    (torch-rgcn, vertical_stacking=False). Padded rows/cols stay zero."""
    R = 2 * num_rels + 1
    s, r, o = edges[:, 0], edges[:, 1], edges[:, 2]
    A = jnp.zeros((n_pad, R, n_pad), jnp.float32)    # (target i, relation, source j)
    A = A.at[s, r, o].add(1.0)                        # forward relations
    A = A.at[o, r + num_rels, s].add(1.0)             # inverse relations
    idx = jnp.arange(num_nodes)
    A = A.at[idx, 2 * num_rels, idx].add(1.0)         # self-loop relation
    row_sum = A.sum(axis=(1, 2), keepdims=True)       # per target node, all relations
    A = A / jnp.maximum(row_sum, 1.0)
    return A.reshape(n_pad, R * n_pad)


def relation_predictor_forward(params, edges, triples, num_nodes, num_rels):
    R = 2 * num_rels + 1
    nemb = params["node_emb"].shape[1]
    nhid1 = params["w1"].shape[2]
    nhid2 = params["w2"].shape[2]
    # DistMult multiplies relation embeddings (width nemb) elementwise with node
    # embeddings (width nhid2); the torch module implicitly requires nemb == nhid2.
    assert nemb == nhid2, "DistMult decoder requires node_embedding == hidden2_size"

    # pad everything to lane-dense multiples of 128 (zero padding is inert: zero A
    # columns / zero W rows & cols / zero bias cols keep the valid region exact).
    n_pad = _round_up(num_nodes, _LANE)
    f0 = _round_up(nemb, _LANE)
    f1 = _round_up(nhid1, _LANE)
    f2 = _round_up(nhid2, _LANE)

    # Layer-1 activation hoisted out of the matmul kernel (computed once, not once
    # per relation) and padded AFTER the relu so padded node rows are exactly zero.
    act0 = jnp.maximum(params["node_emb"] + params["node_emb_bias"], 0.0)
    act0 = _pad2(act0, n_pad, f0).astype(jnp.bfloat16)

    w1 = _pad3(params["w1"], R, f0, f1).astype(jnp.bfloat16)
    b1 = _pad2(params["b1"], 1, f1)                                   # f32 bias
    w2 = _pad3(params["w2"], R, f1, f2).astype(jnp.bfloat16)
    b2 = _pad2(params["b2"], 1, f2)

    a_h32 = build_adjacency_hstack(edges, num_nodes, num_rels, n_pad)
    tm = _pick_tile(n_pad)
    if n_pad // tm == 1 and tm > 128:
        tm //= 2           # keep >= 2 M-blocks so v7x megacore has a parallel axis
    tk = _pick_tile(n_pad)  # divides n_pad, hence divides the stacked R*n_pad axis
    kidx, kcnt = build_block_schedule(a_h32, tm, tk)
    a_h = a_h32.astype(jnp.bfloat16)

    # encoder
    y1 = xw_stacked(act0, w1)                                             # (R*Np, f1) bf16
    h1 = rgcn_contract(a_h, y1, b1, kidx, kcnt, tm, tk, jnp.bfloat16)     # (Np, f1)   bf16
    y2 = xw_stacked(h1, w2)                                               # (R*Np, f2) bf16
    x_pad = rgcn_contract(a_h, y2, b2, kidx, kcnt, tm, tk, jnp.float32)   # (Np, f2)   f32
    x = x_pad[:num_nodes, :nhid2]

    # decoder (DistMult): gather rows in plain JAX glue (bf16), reduce in a tiled kernel
    x_bf = x_pad.astype(jnp.bfloat16)
    rel_pad = _pad2(params["rel_emb"],
                    params["rel_emb"].shape[0], f2).astype(jnp.bfloat16)
    s_emb = x_bf[triples[:, 0]]
    p_emb = rel_pad[triples[:, 1]]
    o_emb = x_bf[triples[:, 2]]
    scores = distmult_score(s_emb, p_emb, o_emb)

    # tiny (nrel, nemb) reduction: cheaper fused by XLA than a dedicated launch
    penalty = jnp.sum(params["rel_emb"] ** 2)
    return scores, penalty, x


def _reference_forward(params, edges, triples, num_nodes, num_rels):
    """Pure-JAX f32 reference for correctness checking."""
    R = 2 * num_rels + 1
    s, r, o = edges[:, 0], edges[:, 1], edges[:, 2]
    A = jnp.zeros((R, num_nodes, num_nodes), jnp.float32)
    A = A.at[r, s, o].add(1.0)
    A = A.at[r + num_rels, o, s].add(1.0)
    idx = jnp.arange(num_nodes)
    A = A.at[2 * num_rels, idx, idx].add(1.0)
    row_sum = A.sum(axis=(0, 2), keepdims=True)
    A = A / jnp.maximum(row_sum, 1.0)

    x = jnp.maximum(params["node_emb"] + params["node_emb_bias"], 0.0)
    x = jnp.einsum("rij,jf,rfo->io", A, x, params["w1"]) + params["b1"]
    x = jnp.einsum("rij,jf,rfo->io", A, x, params["w2"]) + params["b2"]
    s_e = x[triples[:, 0]]
    p_e = params["rel_emb"][triples[:, 1]]
    o_e = x[triples[:, 2]]
    scores = jnp.sum(s_e * p_e * o_e, axis=-1)
    penalty = jnp.sum(params["rel_emb"] ** 2)
    return scores, penalty, x


# ---------------------------------- main ----------------------------------- #

if __name__ == "__main__":
    key = jax.random.PRNGKey(0)
    N, nrel = 16, 3                 # nodes, relations
    nemb = nhid1 = nhid2 = 32       # embedding / hidden sizes (decoder uses nemb)
    R = 2 * nrel + 1
    E, T = 24, 8                    # graph edges, scoring triples

    ks = jax.random.split(key, 10)
    params = {
        "node_emb": jax.random.normal(ks[0], (N, nemb), jnp.float32) * 0.1,
        "node_emb_bias": jnp.zeros((1, nemb), jnp.float32),
        "w1": jax.random.normal(ks[1], (R, nemb, nhid1), jnp.float32)
              * (1.0 / jnp.sqrt(nemb)),
        "b1": jnp.zeros((1, nhid1), jnp.float32),
        "w2": jax.random.normal(ks[2], (R, nhid1, nhid2), jnp.float32)
              * (1.0 / jnp.sqrt(nhid1)),
        "b2": jnp.zeros((1, nhid2), jnp.float32),
        "rel_emb": jax.random.normal(ks[3], (nrel, nemb), jnp.float32) * 0.1,
    }

    # synthetic graph triples (s, r, o)
    edges = jnp.stack([
        jax.random.randint(ks[4], (E,), 0, N),
        jax.random.randint(ks[5], (E,), 0, nrel),
        jax.random.randint(ks[6], (E,), 0, N),
    ], axis=1)

    # query triples to score
    triples = jnp.stack([
        jax.random.randint(ks[7], (T,), 0, N),
        jax.random.randint(ks[8], (T,), 0, nrel),
        jax.random.randint(ks[9], (T,), 0, N),
    ], axis=1)

    scores, penalty, x = relation_predictor_forward(params, edges, triples, N, nrel)
    jax.block_until_ready((scores, penalty, x))

    # correctness check against pure-JAX f32 reference (bf16 MXU inputs -> looser tol)
    ref_scores, ref_penalty, ref_x = _reference_forward(params, edges, triples, N, nrel)
    assert jnp.allclose(scores, ref_scores, rtol=5e-2, atol=1e-3)
    assert jnp.allclose(penalty, ref_penalty, rtol=1e-5, atol=1e-6)
    assert jnp.allclose(x, ref_x, rtol=5e-2, atol=5e-3)

    print("KERNEL_OK")
</pallas_src>

<mosaic_0001>
module attributes {stable_mosaic.version = 11 : i64} {
  func.func @_xw_kernel(%arg0: i32, %arg1: i32, %arg2: memref<128x128xbf16, #tpu.memory_space<vmem>>, %arg3: memref<1x128x128xbf16, #tpu.memory_space<vmem>>, %arg4: memref<128x128xbf16, #tpu.memory_space<vmem>>) attributes {dimension_semantics = [#tpu.dimension_semantics<parallel>, #tpu.dimension_semantics<parallel>], iteration_bounds = array<i64: 7, 1>, scalar_prefetch = 0 : i64, scratch_operands = 0 : i64, tpu.core_type = #tpu.core_type<tc>, window_params = [{transform_indices = @transform_0, window_bounds = array<i64: 128, 128>}, {transform_indices = @transform_1, window_bounds = array<i64: 1, 128, 128>}, {transform_indices = @transform_2, window_bounds = array<i64: 128, 128>}]} {
    %c0 = arith.constant 0 : index
    %c0_0 = arith.constant 0 : index
    %0 = vector.load %arg2[%c0, %c0_0] : memref<128x128xbf16, #tpu.memory_space<vmem>>, vector<128x128xbf16>
    %c0_1 = arith.constant 0 : index
    %c0_2 = arith.constant 0 : index
    %c0_3 = arith.constant 0 : index
    %1 = vector.load %arg3[%c0_1, %c0_2, %c0_3] : memref<1x128x128xbf16, #tpu.memory_space<vmem>>, vector<1x128x128xbf16>
    %2 = vector.shape_cast %1 : vector<1x128x128xbf16> to vector<128x128xbf16>
    %cst = arith.constant dense<0.000000e+00> : vector<128x128xf32>
    %3 = tpu.matmul %0, %2, %cst {dimension_numbers = #tpu.dot_dimension_numbers<[1], [0], [0], [1], [0, 0, 1, 1], [], []>} : vector<128x128xbf16>, vector<128x128xbf16>, vector<128x128xf32> -> vector<128x128xf32>
    %4 = arith.truncf %3 : vector<128x128xf32> to vector<128x128xbf16>
    %c0_4 = arith.constant 0 : index
    %c0_5 = arith.constant 0 : index
    %5 = vector.load %arg4[%c0_4, %c0_5] : memref<128x128xbf16, #tpu.memory_space<vmem>>, vector<128x128xbf16>
    tpu.vector_store %arg4[%c0_4, %c0_5], %4 {strides = array<i32>} : memref<128x128xbf16, #tpu.memory_space<vmem>>, vector<128x128xbf16>,
    return
  }
  func.func @transform_0(%arg0: i32, %arg1: i32) -> (i32, i32) {
    %c0_i32 = arith.constant 0 : i32
    %c0_i32_0 = arith.constant 0 : i32
    return %arg1, %c0_i32 : i32, i32
  }
  func.func @transform_1(%arg0: i32, %arg1: i32) -> (i32, i32, i32) {
    %c0_i32 = arith.constant 0 : i32
    %c0_i32_0 = arith.constant 0 : i32
    %c0_i32_1 = arith.constant 0 : i32
    return %arg0, %c0_i32, %c0_i32_0 : i32, i32, i32
  }
  func.func @transform_2(%arg0: i32, %arg1: i32) -> (i32, i32) {
    %c1_i32 = arith.constant 1 : i32
    %0 = arith.muli %arg0, %c1_i32 : i32
    %1 = arith.addi %0, %arg1 : i32
    %c0_i32 = arith.constant 0 : i32
    %c0_i32_0 = arith.constant 0 : i32
    return %1, %c0_i32 : i32, i32
  }
}

</mosaic_0001>

<llo_original>
// kernel: tpu_custom_call.1
$region0: #{tpu_custom_call.1}
  #allocation0 [shape = 'u32[]', space=smem, size = 0x4, offset = 0x4, fixed_abs, tag = 'smem constant byte address 0x4 - core index']
  #allocation1 [shape = 'u32[144,128]{1,0:T(1,128)}', space=vmem, size = 0x12000, scoped, tag = 'internal scratch']
  %s0 = inlined_call_operand.hbm [shape: bf16[128,128], index: 0, kind: input, shape index: {}]
  %s1 = inlined_call_operand.hbm [shape: bf16[7,128,128], index: 1, kind: input, shape index: {}]
  %s2 = inlined_call_operand.hbm [shape: bf16[896,128], index: 2, kind: output, shape index: {}]
  %s3 = sld [smem:[#allocation0]]
  $region49: #{tpu_custom_call.1} parent=0
    _
  %s5 = ssub.s32 1, %s3
  %s6 = scalar_select 0, %s5, %s3
  $region1: #{tpu_custom_call.1} parent=0
    #allocation2 [shape = 'u8[32768]{0}', space=vmem, size = 0x8000, scoped, tag = 'input window, operand 0, single buffered']
    #allocation3 [shape = 's32[2]{0}', space=sflag, size = 0x8, scoped, tag = 'scoped memory for tpu_custom_call.1']
    #allocation4 [shape = 's32[2]{0}', space=sflag, size = 0x8, scoped, tag = 'scoped memory for tpu_custom_call.1']
    #allocation5 [shape = 'u8[65536]{0}', space=vmem, size = 0x10000, scoped, tag = 'input window, operand 1']
    #allocation6 [shape = 's32[2]{0}', space=sflag, size = 0x8, scoped, tag = 'scoped memory for tpu_custom_call.1']
    #allocation7 [shape = 'u8[65536]{0}', space=vmem, size = 0x10000, scoped, tag = 'output window, operand 0']
    %7 = vsyncpa [#allocation3], 0
    %8 = vsyncpa [#allocation6], 0
    %s9 = scalar_lea.sflag [#allocation6], 1
    %10 = vsyncpa %s9, 0
    %11 = vsyncpa [#allocation4], 0
    %s12 = scalar_lea.sflag [#allocation4], 1
    %13 = vsyncpa %s12, 0
    loop: start=0, step=1, limit=9
    $region2: #{tpu_custom_call.1} parent=1 // loop_pre_header
      _
    $region3: #{tpu_custom_call.1} parent=1 // loop_header
      %s15 = sphi 0, %s19
      %p16 = scmp.ge.s32.totalorder %s15, 9
      %s22 = sphi 0, %s34
      %s23 = sphi 0, %s30
      %s24 = sphi 0, %s22
      %s25 = sphi 0, %s23
      %s26 = sphi 0, %s24
      %s27 = sphi 0, %s25
      %s37 = sphi 0, %s39
      %s40 = sphi 0, %s37
      %s41 = sphi 0, %s40
      %s57 = sphi 0, %s41
      %s63 = sphi 0, %s65
      %s66 = sphi 0, %s63
      %s67 = sphi 0, %s66
      %s83 = sphi 0, %s67
      %s91 = sphi 0, %s93
      %s94 = sphi 0, %s91
      %s95 = sphi 0, %s94
      %s111 = sphi 0, %s95
    $region4: #{tpu_custom_call.1} parent=1 // loop_header_branch
      %18 = sbr.rel (%p16) target = $region8
    $region5: #{tpu_custom_call.1} parent=1 // loop_body
      %s20 = ssub.s32 %s15, 1
      %s21 = ssub.s32 %s15, 2
      %s28 = sadd.s32 1, %s23
      %p29 = scmp.ge.s32.totalorder %s28, 1
      %s30 = scalar_select %p29, 0, %s28
      %s31 = sadd.s32 1, %s22
      %s32 = scalar_select %p29, %s31, %s22
      %p33 = scmp.ge.s32.totalorder %s32, 7
      %s34 = scalar_select %p33, 0, %s32
      %s35 = ssub.s32 %s23, %s30
      %p36 = scmp.eq.s32.totalorder %s35, 0
      %s38 = sadd.s32 %s37, 1
      %s39 = scalar_select %p36, %s37, %s38
      %p42 = pneg %p36
      %p43 = scmp.eq.s32.totalorder %s15, 6
      %p44 = por %p42, %p43
      %p45 = scmp.ne.s32.totalorder %s37, %s40
      %p46 = scmp.eq.s32.totalorder %s15, 0
      %p47 = por %p45, %p46
      %p48 = scmp.ne.s32.totalorder %s37, %s40
      %p49 = scmp.eq.s32.totalorder %s20, 6
      %p50 = por %p48, %p49
      %p51 = scmp.ne.s32.totalorder %s40, %s41
      %p52 = scmp.eq.s32.totalorder %s20, 0
      %p53 = por %p51, %p52
      %p54 = scmp.ne.s32.totalorder %s40, %s41
      %p55 = scmp.eq.s32.totalorder %s21, 6
      %p56 = por %p54, %p55
      %p58 = scmp.ne.s32.totalorder %s41, %s57
      %p59 = scmp.eq.s32.totalorder %s21, 0
      %p60 = por %p58, %p59
      %s61 = ssub.s32 %s22, %s34
      %p62 = scmp.eq.s32.totalorder %s61, 0
      %s64 = sadd.s32 %s63, 1
      %s65 = scalar_select %p62, %s63, %s64
      %p68 = pneg %p62
      %p69 = scmp.eq.s32.totalorder %s15, 6
      %p70 = por %p68, %p69
      %p71 = scmp.ne.s32.totalorder %s63, %s66
      %p72 = scmp.eq.s32.totalorder %s15, 0
      %p73 = por %p71, %p72
      %p74 = scmp.ne.s32.totalorder %s63, %s66
      %p75 = scmp.eq.s32.totalorder %s20, 6
      %p76 = por %p74, %p75
      %p77 = scmp.ne.s32.totalorder %s66, %s67
      %p78 = scmp.eq.s32.totalorder %s20, 0
      %p79 = por %p77, %p78
      %p80 = scmp.ne.s32.totalorder %s66, %s67
      %p81 = scmp.eq.s32.totalorder %s21, 6
      %p82 = por %p80, %p81
      %p84 = scmp.ne.s32.totalorder %s67, %s83
      %p85 = scmp.eq.s32.totalorder %s21, 0
      %p86 = por %p84, %p85
      %s87 = sadd.s32 %s22, %s23
      %s88 = sadd.s32 %s34, %s30
      %s89 = ssub.s32 %s87, %s88
      %p90 = scmp.eq.s32.totalorder %s89, 0
      %s92 = sadd.s32 %s91, 1
      %s93 = scalar_select %p90, %s91, %s92
      %p96 = pneg %p90
      %p97 = scmp.eq.s32.totalorder %s15, 6
      %p98 = por %p96, %p97
      %p99 = scmp.ne.s32.totalorder %s91, %s94
      %p100 = scmp.eq.s32.totalorder %s15, 0
      %p101 = por %p99, %p100
      %p102 = scmp.ne.s32.totalorder %s91, %s94
      %p103 = scmp.eq.s32.totalorder %s20, 6
      %p104 = por %p102, %p103
      %p105 = scmp.ne.s32.totalorder %s94, %s95
      %p106 = scmp.eq.s32.totalorder %s20, 0
      %p107 = por %p105, %p106
      %p108 = scmp.ne.s32.totalorder %s94, %s95
      %p109 = scmp.eq.s32.totalorder %s21, 6
      %p110 = por %p108, %p109
      %p112 = scmp.ne.s32.totalorder %s95, %s111
      %p113 = scmp.eq.s32.totalorder %s21, 0
      %p114 = por %p112, %p113
      %p115 = scmp.le.s32.totalorder 1, %s15
      %p116 = scmp.lt.s32.totalorder %s15, 8
      %p117 = pnand %p115, %p116
      %p118 = pneg %p117
      // Predicated region
      $region9: #{tpu_custom_call.1} parent=5 // pred_check
        _
      $region10: #{tpu_custom_call.1} parent=5 // pred_check_branch
        %120 = sbr.rel (%p117) target = $region12
      $region11: #{tpu_custom_call.1} parent=5 // pred_region
        %s121 = ssub.s32 %s15, 1
        // Predicated region
        $region13: #{tpu_custom_call.1} parent=11 // pred_check
          %p122 = pneg %p53
        $region14: #{tpu_custom_call.1} parent=11 // pred_check_branch
          %124 = sbr.rel (%p122) target = $region16
        $region15: #{tpu_custom_call.1} parent=11 // pred_region
          %s125 = smul.u32 16, %s25
          %s127 = ssub.s32 1024, 1024
          %128 = vsyncadd [#allocation3], %s127
          %s129 = smul.addr %s125, 64
          %s130 = scalar_lea.hbm %s0, %s129
          %s131 = sshll.u32 [#allocation2], 4
          %s132 = int_to_ptr.vmem [resolvable:$true] %s131
          %137 = dma.hbm_to_vmem [thread:$0]  %s130, 1024, %s132, [#allocation3], 64, 64, 4
        $region16: #{tpu_custom_call.1} parent=11 // pred_fallthru
          _
      $region12: #{tpu_custom_call.1} parent=5 // pred_fallthru
        _
      %p138 = scmp.lt.s32.totalorder %s15, 7
      // Predicated region
      $region17: #{tpu_custom_call.1} parent=5 // pred_check
        %p139 = pneg %p138
      $region18: #{tpu_custom_call.1} parent=5 // pred_check_branch
        %141 = sbr.rel (%p139) target = $region20
      $region19: #{tpu_custom_call.1} parent=5 // pred_region
        // Predicated region
        $region21: #{tpu_custom_call.1} parent=19 // pred_check
          %p142 = pneg %p73
        $region22: #{tpu_custom_call.1} parent=19 // pred_check_branch
          %144 = sbr.rel (%p142) target = $region24
        $region23: #{tpu_custom_call.1} parent=19 // pred_region
          %s145 = sand.u32 %s63, 1
          %s146 = scalar_lea.sflag [#allocation6], %s145
          %s147 = sand.u32 %s63, 1
          %s148 = smul.addr %s147, 64
          %s149 = scalar_lea.vmem [#allocation5], %s148
          %s151 = ssub.s32 1024, 1024
          %152 = vsyncadd %s146, %s151
          %s153 = smul.addr %s22, 16
          %s154 = smul.addr %s153, 64
          %s155 = scalar_lea.hbm %s1, %s154
          %s156 = sshll.u32 %s149, 4
          %s157 = int_to_ptr.vmem [resolvable:$true] %s156
          %162 = dma.hbm_to_vmem [thread:$0]  %s155, 1024, %s157, %s146, 64, 64, 4
        $region24: #{tpu_custom_call.1} parent=19 // pred_fallthru
          _
      $region20: #{tpu_custom_call.1} parent=5 // pred_fallthru
        _
      %p163 = scmp.le.s32.totalorder 1, %s15
      %p164 = scmp.lt.s32.totalorder %s15, 8
      %p165 = pnand %p163, %p164
      %p166 = pneg %p165
      // Predicated region
      $region25: #{tpu_custom_call.1} parent=5 // pred_check
        _
      $region26: #{tpu_custom_call.1} parent=5 // pred_check_branch
        %168 = sbr.rel (%p165) target = $region28
      $region27: #{tpu_custom_call.1} parent=5 // pred_region
        %s169 = ssub.s32 %s15, 1
        // Predicated region
        $region29: #{tpu_custom_call.1} parent=27 // pred_check
          %p170 = pneg %p53
        $region30: #{tpu_custom_call.1} parent=27 // pred_check_branch
          %172 = sbr.rel (%p170) target = $region32
        $region31: #{tpu_custom_call.1} parent=27 // pred_region
          %173 = dma.done [#allocation3], 1024
        $region32: #{tpu_custom_call.1} parent=27 // pred_fallthru
          _
        %s174 = sand.u32 %s66, 1
        %s175 = scalar_lea.sflag [#allocation6], %s174
        %s176 = sand.u32 %s66, 1
        %s177 = smul.addr %s176, 64
        %s178 = scalar_lea.vmem [#allocation5], %s177
        // Predicated region
        $region33: #{tpu_custom_call.1} parent=27 // pred_check
          %p179 = pneg %p79
        $region34: #{tpu_custom_call.1} parent=27 // pred_check_branch
          %181 = sbr.rel (%p179) target = $region36
        $region35: #{tpu_custom_call.1} parent=27 // pred_region
          %182 = dma.done %s175, 1024
        $region36: #{tpu_custom_call.1} parent=27 // pred_fallthru
          _
        %p183 = pneg %p53
        %p184 = pneg %p50
        %s185 = sand.u32 %s66, 1
        %s186 = scalar_lea.sflag [#allocation6], %s185
        %s187 = sand.u32 %s66, 1
        %s188 = smul.addr %s187, 64
        %s189 = scalar_lea.vmem [#allocation5], %s188
        %p190 = pneg %p79
        %p191 = pneg %p76
        %p192 = pneg %p107
        %p193 = pneg %p104
        %s194 = sand.u32 %s94, 1
        %s195 = scalar_lea.sflag [#allocation4], %s194
        %s196 = sand.u32 %s94, 1
        %s197 = smul.addr %s196, 64
        %s198 = scalar_lea.vmem [#allocation7], %s197
        %s199 = smul.u32 16, %s25
        %s200 = sadd.s32 %s24, %s25
        %s201 = smul.u32 16, %s200
        %v203 = vld [vmem:[#allocation2] sm:$0xf]
        %v204 = vld [vmem:[#allocation2 + $0x4] sm:$0xf]
        %v205 = vld [vmem:[#allocation2 + $0x8] sm:$0xf]
        %v206 = vld [vmem:[#allocation2 + $0xc] sm:$0xf]
        %v207 = vld [vmem:[#allocation2 + $0x10] sm:$0xf]
        %v208 = vld [vmem:[#allocation2 + $0x14] sm:$0xf]
        %v209 = vld [vmem:[#allocation2 + $0x18] sm:$0xf]
        %v210 = vld [vmem:[#allocation2 + $0x1c] sm:$0xf]
        %v211 = vld [vmem:[#allocation2 + $0x20] sm:$0xf]
        %v212 = vld [vmem:[#allocation2 + $0x24] sm:$0xf]
        %v213 = vld [vmem:[#allocation2 + $0x28] sm:$0xf]
        %v214 = vld [vmem:[#allocation2 + $0x2c] sm:$0xf]
        %v215 = vld [vmem:[#allocation2 + $0x30] sm:$0xf]
        %v216 = vld [vmem:[#allocation2 + $0x34] sm:$0xf]
        %v217 = vld [vmem:[#allocation2 + $0x38] sm:$0xf]
        %v218 = vld [vmem:[#allocation2 + $0x3c] sm:$0xf]
        %v219 = vld [vmem:[%s178] sm:$0xf]
        %v220 = vld [vmem:[%s178 + $0x4] sm:$0xf]
        %v221 = vld [vmem:[%s178 + $0x8] sm:$0xf]
        %v222 = vld [vmem:[%s178 + $0xc] sm:$0xf]
        %v223 = vld [vmem:[%s178 + $0x10] sm:$0xf]
        %v224 = vld [vmem:[%s178 + $0x14] sm:$0xf]
        %v225 = vld [vmem:[%s178 + $0x18] sm:$0xf]
        %v226 = vld [vmem:[%s178 + $0x1c] sm:$0xf]
        %v227 = vld [vmem:[%s178 + $0x20] sm:$0xf]
        %v228 = vld [vmem:[%s178 + $0x24] sm:$0xf]
        %v229 = vld [vmem:[%s178 + $0x28] sm:$0xf]
        %v230 = vld [vmem:[%s178 + $0x2c] sm:$0xf]
        %v231 = vld [vmem:[%s178 + $0x30] sm:$0xf]
        %v232 = vld [vmem:[%s178 + $0x34] sm:$0xf]
        %v233 = vld [vmem:[%s178 + $0x38] sm:$0xf]
        %v234 = vld [vmem:[%s178 + $0x3c] sm:$0xf]
        %v251 = vunpack.c.l.b16 %v203
        %v252 = vunpack.c.l.b16 %v204
        %v253 = vunpack.c.l.b16 %v205
        %v254 = vunpack.c.l.b16 %v206
        %v255 = vunpack.c.l.b16 %v207
        %v256 = vunpack.c.l.b16 %v208
        %v257 = vunpack.c.l.b16 %v209
        %v258 = vunpack.c.l.b16 %v210
        %v259 = vunpack.c.l.b16 %v211
        %v260 = vunpack.c.l.b16 %v212
        %v261 = vunpack.c.l.b16 %v213
        %v262 = vunpack.c.l.b16 %v214
        %v263 = vunpack.c.l.b16 %v215
        %v264 = vunpack.c.l.b16 %v216
        %v265 = vunpack.c.l.b16 %v217
        %v266 = vunpack.c.l.b16 %v218
        %v267 = vpack.c.b16 %v252, %v251
        %v268 = vpack.c.b16 %v254, %v253
        %v269 = vpack.c.b16 %v256, %v255
        %v270 = vpack.c.b16 %v258, %v257
        %v271 = vpack.c.b16 %v260, %v259
        %v272 = vpack.c.b16 %v262, %v261
        %v273 = vpack.c.b16 %v264, %v263
        %v274 = vpack.c.b16 %v266, %v265
        %v299 = vunpack.c.l.b16 %v219
        %v300 = vunpack.c.l.b16 %v220
        %v301 = vunpack.c.l.b16 %v221
        %v302 = vunpack.c.l.b16 %v222
        %v303 = vunpack.c.l.b16 %v223
        %v304 = vunpack.c.l.b16 %v224
        %v305 = vunpack.c.l.b16 %v225
        %v306 = vunpack.c.l.b16 %v226
        %v307 = vunpack.c.l.b16 %v227
        %v308 = vunpack.c.l.b16 %v228
        %v309 = vunpack.c.l.b16 %v229
        %v310 = vunpack.c.l.b16 %v230
        %v311 = vunpack.c.l.b16 %v231
        %v312 = vunpack.c.l.b16 %v232
        %v313 = vunpack.c.l.b16 %v233
        %v314 = vunpack.c.l.b16 %v234
        %v315 = vpack.c.b16 %v300, %v299
        %v316 = vpack.c.b16 %v302, %v301
        %v317 = vpack.c.b16 %v304, %v303
        %v318 = vpack.c.b16 %v306, %v305
        %v319 = vpack.c.b16 %v308, %v307
        %v320 = vpack.c.b16 %v310, %v309
        %v321 = vpack.c.b16 %v312, %v311
        %v322 = vpack.c.b16 %v314, %v313
        %331 = vmatprep.subr.bf16.mxu0 0
        %332 = vmatpush1.bf16.msra.mxu0 %v315
        %333 = vmatprep.subr.bf16.mxu0 0
        %334 = vmatpush1.bf16.msra.mxu0 %v316
        %335 = vmatprep.subr.bf16.mxu0 0
        %336 = vmatpush1.bf16.msra.mxu0 %v317
        %337 = vmatprep.subr.bf16.mxu0 0
        %338 = vmatpush1.bf16.msra.mxu0 %v318
        %339 = vmatprep.subr.bf16.mxu0 0
        %340 = vmatpush1.bf16.msra.mxu0 %v319
        %341 = vmatprep.subr.bf16.mxu0 0
        %342 = vmatpush1.bf16.msra.mxu0 %v320
        %343 = vmatprep.subr.bf16.mxu0 0
        %344 = vmatpush1.bf16.msra.mxu0 %v321
        %345 = vmatprep.subr.bf16.mxu0 0
        %346 = vmatpush1.bf16.msra.mxu0 %v322
        %347 = vmatprep.subr.bf16.mxu0 0
        %348 = vmatpush1.bf16.msra.mxu0 0
        %349 = vmatprep.subr.bf16.mxu0 0
        %350 = vmatpush1.bf16.msra.mxu0 0
        %351 = vmatprep.subr.bf16.mxu0 0
        %352 = vmatpush1.bf16.msra.mxu0 0
        %353 = vmatprep.subr.bf16.mxu0 0
        %354 = vmatpush1.bf16.msra.mxu0 0
        %355 = vmatprep.subr.bf16.mxu0 0
        %356 = vmatpush1.bf16.msra.mxu0 0
        %357 = vmatprep.subr.bf16.mxu0 0
        %358 = vmatpush1.bf16.msra.mxu0 0
        %359 = vmatprep.subr.bf16.mxu0 0
        %360 = vmatpush1.bf16.msra.mxu0 0
        %361 = vmatprep.subr.bf16.mxu0 0
        %362 = vmatpush1.bf16.msra.mxu0 0
        %363 = vmatprep.mubr.bf16.mxu0 0
        %364 = vmatmul.mubr.bf16.gmra.mrb[0].mxu0 %v267
        %v365 = vpop.f32.mrb[0].mxu0
        %v366 = vadd.f32 0.0, %v365
        %v367 = vpop.f32.mrb[0].mxu0
        %v368 = vpop.f32.mrb[0].mxu0
        %v369 = vadd.f32 0.0, %v368
        %v370 = vpop.f32.mrb[0].mxu0
        %371 = vmatprep.mubr.bf16.mxu0 0
        %372 = vmatmul.mubr.bf16.gmra.mrb[0].mxu0 %v268
        %v373 = vpop.f32.mrb[0].mxu0
        %v374 = vadd.f32 0.0, %v373
        %v375 = vpop.f32.mrb[0].mxu0
        %v376 = vpop.f32.mrb[0].mxu0
        %v377 = vadd.f32 0.0, %v376
        %v378 = vpop.f32.mrb[0].mxu0
        %379 = vmatprep.mubr.bf16.mxu0 0
        %380 = vmatmul.mubr.bf16.gmra.mrb[0].mxu0 %v269
        %v381 = vpop.f32.mrb[0].mxu0
        %v382 = vadd.f32 0.0, %v381
        %v383 = vpop.f32.mrb[0].mxu0
        %v384 = vpop.f32.mrb[0].mxu0
        %v385 = vadd.f32 0.0, %v384
        %v386 = vpop.f32.mrb[0].mxu0
        %387 = vmatprep.mubr.bf16.mxu0 0
        %388 = vmatmul.mubr.bf16.gmra.mrb[0].mxu0 %v270
        %v389 = vpop.f32.mrb[0].mxu0
        %v390 = vadd.f32 0.0, %v389
        %v391 = vpop.f32.mrb[0].mxu0
        %v392 = vpop.f32.mrb[0].mxu0
        %v393 = vadd.f32 0.0, %v392
        %v394 = vpop.f32.mrb[0].mxu0
        %395 = vmatprep.mubr.bf16.mxu0 0
        %396 = vmatmul.mubr.bf16.gmra.mrb[0].mxu0 %v271
        %v397 = vpop.f32.mrb[0].mxu0
        %v398 = vadd.f32 0.0, %v397
        %v399 = vpop.f32.mrb[0].mxu0
        %v400 = vpop.f32.mrb[0].mxu0
        %v401 = vadd.f32 0.0, %v400
        %v402 = vpop.f32.mrb[0].mxu0
        %403 = vmatprep.mubr.bf16.mxu0 0
        %404 = vmatmul.mubr.bf16.gmra.mrb[0].mxu0 %v272
        %v405 = vpop.f32.mrb[0].mxu0
        %v406 = vadd.f32 0.0, %v405
        %v407 = vpop.f32.mrb[0].mxu0
        %v408 = vpop.f32.mrb[0].mxu0
        %v409 = vadd.f32 0.0, %v408
        %v410 = vpop.f32.mrb[0].mxu0
        %411 = vmatprep.mubr.bf16.mxu0 0
        %412 = vmatmul.mubr.bf16.gmra.mrb[0].mxu0 %v273
        %v413 = vpop.f32.mrb[0].mxu0
        %v414 = vadd.f32 0.0, %v413
        %v415 = vpop.f32.mrb[0].mxu0
        %v416 = vpop.f32.mrb[0].mxu0
        %v417 = vadd.f32 0.0, %v416
        %v418 = vpop.f32.mrb[0].mxu0
        %419 = vmatprep.mubr.bf16.mxu0 0
        %420 = vmatmul.mubr.bf16.gmra.mrb[0].mxu0 %v274
        %v421 = vpop.f32.mrb[0].mxu0
        %v422 = vadd.f32 0.0, %v421
        %v423 = vpop.f32.mrb[0].mxu0
        %v424 = vpop.f32.mrb[0].mxu0
        %v425 = vadd.f32 0.0, %v424
        %v426 = vpop.f32.mrb[0].mxu0
        %427 = vdwg.mxu0
        %v428 = vpack.c.bf16 %v369, %v366
        %v429 = vpack.c.bf16 %v377, %v374
        %v430 = vpack.c.bf16 %v385, %v382
        %v431 = vpack.c.bf16 %v393, %v390
        %v432 = vpack.c.bf16 %v401, %v398
        %v433 = vpack.c.bf16 %v409, %v406
        %v434 = vpack.c.bf16 %v417, %v414
        %v435 = vpack.c.bf16 %v425, %v422
        %v444 = vunpack.c.l.b16 %v428
        %v445 = vunpack.c.h.b16 %v428
        %v446 = vunpack.c.l.b16 %v429
        %v447 = vunpack.c.h.b16 %v429
        %v448 = vunpack.c.l.b16 %v430
        %v449 = vunpack.c.h.b16 %v430
        %v450 = vunpack.c.l.b16 %v431
        %v451 = vunpack.c.h.b16 %v431
        %v452 = vunpack.c.l.b16 %v432
        %v453 = vunpack.c.h.b16 %v432
        %v454 = vunpack.c.l.b16 %v433
        %v455 = vunpack.c.h.b16 %v433
        %v456 = vunpack.c.l.b16 %v434
        %v457 = vunpack.c.h.b16 %v434
        %v458 = vunpack.c.l.b16 %v435
        %v459 = vunpack.c.h.b16 %v435
        %v460 = vpack.c.b16 %v444, %v444
        %v461 = vpack.c.b16 %v445, %v445
        %v462 = vpack.c.b16 %v446, %v446
        %v463 = vpack.c.b16 %v447, %v447
        %v464 = vpack.c.b16 %v448, %v448
        %v465 = vpack.c.b16 %v449, %v449
        %v466 = vpack.c.b16 %v450, %v450
        %v467 = vpack.c.b16 %v451, %v451
        %v468 = vpack.c.b16 %v452, %v452
        %v469 = vpack.c.b16 %v453, %v453
        %v470 = vpack.c.b16 %v454, %v454
        %v471 = vpack.c.b16 %v455, %v455
        %v472 = vpack.c.b16 %v456, %v456
        %v473 = vpack.c.b16 %v457, %v457
        %v474 = vpack.c.b16 %v458, %v458
        %v475 = vpack.c.b16 %v459, %v459
        %492 = vst [vmem:[%s198] sm:$0xf] %v460
        %493 = vst [vmem:[%s198 + $0x4] sm:$0xf] %v461
        %494 = vst [vmem:[%s198 + $0x8] sm:$0xf] %v462
        %495 = vst [vmem:[%s198 + $0xc] sm:$0xf] %v463
        %496 = vst [vmem:[%s198 + $0x10] sm:$0xf] %v464
        %497 = vst [vmem:[%s198 + $0x14] sm:$0xf] %v465
        %498 = vst [vmem:[%s198 + $0x18] sm:$0xf] %v466
        %499 = vst [vmem:[%s198 + $0x1c] sm:$0xf] %v467
        %500 = vst [vmem:[%s198 + $0x20] sm:$0xf] %v468
        %501 = vst [vmem:[%s198 + $0x24] sm:$0xf] %v469
        %502 = vst [vmem:[%s198 + $0x28] sm:$0xf] %v470
        %503 = vst [vmem:[%s198 + $0x2c] sm:$0xf] %v471
        %504 = vst [vmem:[%s198 + $0x30] sm:$0xf] %v472
        %505 = vst [vmem:[%s198 + $0x34] sm:$0xf] %v473
        %506 = vst [vmem:[%s198 + $0x38] sm:$0xf] %v474
        %507 = vst [vmem:[%s198 + $0x3c] sm:$0xf] %v475
        %s508 = sand.u32 %s94, 1
        %s509 = scalar_lea.sflag [#allocation4], %s508
        %s510 = sand.u32 %s94, 1
        %s511 = smul.addr %s510, 64
        %s512 = scalar_lea.vmem [#allocation7], %s511
        // Predicated region
        $region37: #{tpu_custom_call.1} parent=27 // pred_check
          %p513 = pneg %p104
        $region38: #{tpu_custom_call.1} parent=27 // pred_check_branch
          %515 = sbr.rel (%p513) target = $region40
        $region39: #{tpu_custom_call.1} parent=27 // pred_region
          %s516 = sadd.s32 %s24, %s25
          %s517 = smul.u32 16, %s516
          %s519 = ssub.s32 1024, 1024
          %520 = vsyncadd %s509, %s519
          %s521 = smul.addr %s517, 64
          %s522 = scalar_lea.hbm %s2, %s521
          %s523 = sshll.u32 %s512, 4
          %s524 = int_to_ptr.vmem [resolvable:$true] %s523
          %529 = dma.vmem_to_hbm [thread:$0]  %s524, 1024, %s522, %s509, 64, 64, 4
        $region40: #{tpu_custom_call.1} parent=27 // pred_fallthru
          _
      $region28: #{tpu_custom_call.1} parent=5 // pred_fallthru
        _
      %p530 = scmp.le.s32.totalorder 2, %s15
      // Predicated region
      $region41: #{tpu_custom_call.1} parent=5 // pred_check
        %p531 = pneg %p530
      $region42: #{tpu_custom_call.1} parent=5 // pred_check_branch
        %533 = sbr.rel (%p531) target = $region44
      $region43: #{tpu_custom_call.1} parent=5 // pred_region
        %s534 = ssub.s32 %s15, 2
        // Predicated region
        $region45: #{tpu_custom_call.1} parent=43 // pred_check
          %p535 = pneg %p110
        $region46: #{tpu_custom_call.1} parent=43 // pred_check_branch
          %537 = sbr.rel (%p535) target = $region48
        $region47: #{tpu_custom_call.1} parent=43 // pred_region
          %s538 = sand.u32 %s95, 1
          %s539 = scalar_lea.sflag [#allocation4], %s538
          %s540 = sand.u32 %s95, 1
          %s541 = smul.addr %s540, 64
          %s542 = scalar_lea.vmem [#allocation7], %s541
          %543 = dma.done %s539, 1024
        $region48: #{tpu_custom_call.1} parent=43 // pred_fallthru
          _
      $region44: #{tpu_custom_call.1} parent=5 // pred_fallthru
        _
    $region6: #{tpu_custom_call.1} parent=1 // loop_footer
      %s19 = sadd.s32 1, %s15
    $region7: #{tpu_custom_call.1} parent=1 // loop_footer_branch
      %14 = sbr.rel target = $region3
    $region8: #{tpu_custom_call.1} parent=1 // loop_exit
      _
    %544 = vsyncpa [#allocation3], 1
    %s545 = scalar_lea.sflag [#allocation3], 1
    %546 = vsyncpa %s545, 1
    %547 = vsyncpa [#allocation6], 1
    %s548 = scalar_lea.sflag [#allocation6], 1
    %549 = vsyncpa %s548, 1
    %550 = vsyncpa [#allocation4], 1
    %s551 = scalar_lea.sflag [#allocation4], 1
    %552 = vsyncpa %s551, 1

</llo_original>
